<compile_context>
chip_gen: v7x
topology: tpu7x:2x2x1
jax: 0.10.0
libtpu: 0.0.40
codegen_flags: <defaults>
</compile_context>

<pallas_src>
import math
import jax
import jax.numpy as jnp
from jax.experimental import pallas as pl
from jax.experimental.pallas import tpu as pltpu


def listnet_kernel(x_ref, w1_ref, b1_ref, w2_ref, b2_ref, o_ref):
    # x_ref: [tile, F]  w1_ref: [H, F]  b1_ref/w2_ref: [H, 1]  b2_ref: [1] (SMEM)
    # Hidden layer, transposed result: hT = relu(W1 @ x^T + b1) -> [H, tile].
    # dot_general contracts F on both operands, so x never has to be
    # transposed/materialized as [F, N] in HBM or VMEM.
    h = jax.lax.dot_general(
        w1_ref[...], x_ref[...],
        dimension_numbers=(((1,), (1,)), ((), ())),
        preferred_element_type=jnp.float32,
    )
    h = jnp.maximum(h + b1_ref[...], 0.0)          # b1 [H,1] broadcasts over lanes
    # Output layer: logits^T = sum_H(hT * w2) + b2 -> [1, tile]
    # VPU multiply + sublane (XLU) reduction over H=32; keeps output lane-dense.
    out = jnp.sum(h * w2_ref[...], axis=0, keepdims=True)
    o_ref[...] = (out + b2_ref[0]).astype(o_ref.dtype)


def listnet_forward(x, w1, b1, w2, b2, *, tile_n=16384):
    """x: [..., F] float32.  w1: [H, F], b1: [H], w2: [1, H], b2: [1]."""
    orig_shape = x.shape
    F = orig_shape[-1]
    H = w1.shape[0]
    x2d = x.reshape(-1, F)
    N = x2d.shape[0]

    # Row tiling.  No transpose, no pad: single block (== full dims) when N is
    # small, otherwise fixed 16384-row tiles (multiple of 8 for x sublanes and
    # of 128 for the lane-dense output) with a ragged, Pallas-masked last block.
    tn = N if N <= tile_n else tile_n
    grid = (pl.cdiv(N, tn),)

    b1_col = b1.reshape(H, 1)   # broadcast over lanes inside the kernel
    w2_col = w2.reshape(H, 1)   # column vector for the H-reduction
    b2_s = b2.reshape(1)        # SMEM scalar

    cost = pl.CostEstimate(
        flops=2 * N * F * H + 3 * N * H,
        transcendentals=0,
        bytes_accessed=N * (F + 1) * 4 + (H * F + 2 * H + 1) * 4,
    )

    out = pl.pallas_call(
        listnet_kernel,
        out_shape=jax.ShapeDtypeStruct((1, N), x.dtype),
        grid=grid,
        in_specs=[
            pl.BlockSpec((tn, F), lambda i: (i, 0)),   # x tile, read straight from HBM layout
            pl.BlockSpec((H, F), lambda i: (0, 0)),    # W1, VMEM-resident
            pl.BlockSpec((H, 1), lambda i: (0, 0)),    # b1, VMEM-resident
            pl.BlockSpec((H, 1), lambda i: (0, 0)),    # w2 column, VMEM-resident
            pl.BlockSpec(memory_space=pltpu.MemorySpace.SMEM),  # b2 scalar
        ],
        out_specs=pl.BlockSpec((1, tn), lambda i: (0, i)),      # lane-dense output
        compiler_params=pltpu.CompilerParams(
            dimension_semantics=("parallel",),
            vmem_limit_bytes=40 * 1024 * 1024,   # > v5e's 16 MiB default scope, < v7x physical
        ),
        cost_estimate=cost,
    )(x2d, w1, b1_col, w2_col, b2_s)

    return out[0].reshape(*orig_shape[:-1], 1)


def init_listnet_params(key, num_input_features, hidden_dim):
    """Deterministic init mimicking torch.nn.Linear defaults (uniform +-1/sqrt(fan_in))."""
    k1, k2, k3, k4 = jax.random.split(key, 4)
    bound1 = 1.0 / math.sqrt(num_input_features)
    w1 = jax.random.uniform(k1, (hidden_dim, num_input_features),
                            minval=-bound1, maxval=bound1, dtype=jnp.float32)
    b1 = jax.random.uniform(k2, (hidden_dim,),
                            minval=-bound1, maxval=bound1, dtype=jnp.float32)
    bound2 = 1.0 / math.sqrt(hidden_dim)
    w2 = jax.random.uniform(k3, (1, hidden_dim),
                            minval=-bound2, maxval=bound2, dtype=jnp.float32)
    b2 = jax.random.uniform(k4, (1,),
                            minval=-bound2, maxval=bound2, dtype=jnp.float32)
    return w1, b1, w2, b2


if __name__ == "__main__":
    num_input_features = 16
    hidden_dim = 32
    batch, list_size = 2, 8

    key = jax.random.PRNGKey(0)
    kx, kp = jax.random.split(key)
    x = jax.random.normal(kx, (batch, list_size, num_input_features), dtype=jnp.float32)
    w1, b1, w2, b2 = init_listnet_params(kp, num_input_features, hidden_dim)

    logits = listnet_forward(x, w1, b1, w2, b2)
    logits = jax.block_until_ready(logits)

    # Pure-JAX reference (same math as the PyTorch module), highest matmul precision.
    h_ref = jnp.maximum(
        jnp.einsum("blf,hf->blh", x, w1, precision=jax.lax.Precision.HIGHEST) + b1, 0.0)
    ref = jnp.einsum("blh,oh->blo", h_ref, w2, precision=jax.lax.Precision.HIGHEST) + b2

    assert logits.shape == (batch, list_size, 1), logits.shape
    assert jnp.allclose(logits, ref, atol=1e-4, rtol=1e-4), "mismatch vs reference"

    print("KERNEL_OK")
</pallas_src>

<mosaic_0001>
module attributes {stable_mosaic.version = 11 : i64} {
  func.func @listnet_kernel(%arg0: i32, %arg1: memref<16x16xf32, #tpu.memory_space<vmem>>, %arg2: memref<32x16xf32, #tpu.memory_space<vmem>>, %arg3: memref<32x1xf32, #tpu.memory_space<vmem>>, %arg4: memref<32x1xf32, #tpu.memory_space<vmem>>, %arg5: memref<1xf32, #tpu.memory_space<smem>>, %arg6: memref<1x16xf32, #tpu.memory_space<vmem>>) attributes {dimension_semantics = [#tpu.dimension_semantics<parallel>], iteration_bounds = array<i64: 1>, scalar_prefetch = 0 : i64, scratch_operands = 0 : i64, tpu.core_type = #tpu.core_type<tc>, window_params = [{transform_indices = @transform_0, window_bounds = array<i64: 16, 16>}, {pipeline_mode = #tpu.pipeline_mode<synchronous>, transform_indices = @transform_1, window_bounds = array<i64: 32, 16>}, {pipeline_mode = #tpu.pipeline_mode<synchronous>, transform_indices = @transform_2, window_bounds = array<i64: 32, 1>}, {pipeline_mode = #tpu.pipeline_mode<synchronous>, transform_indices = @transform_3, window_bounds = array<i64: 32, 1>}, {transform_indices = @transform_4, window_bounds = array<i64: 1>}, {transform_indices = @transform_5, window_bounds = array<i64: 1, 16>}]} {
    %c0 = arith.constant 0 : index
    %c0_0 = arith.constant 0 : index
    %0 = vector.load %arg2[%c0, %c0_0] : memref<32x16xf32, #tpu.memory_space<vmem>>, vector<32x16xf32>
    %c0_1 = arith.constant 0 : index
    %c0_2 = arith.constant 0 : index
    %1 = vector.load %arg1[%c0_1, %c0_2] : memref<16x16xf32, #tpu.memory_space<vmem>>, vector<16x16xf32>
    %cst = arith.constant dense<0.000000e+00> : vector<32x16xf32>
    %2 = tpu.matmul %0, %1, %cst {dimension_numbers = #tpu.dot_dimension_numbers<[1], [1], [0], [0], [0, 0, 1, 0], [], []>} : vector<32x16xf32>, vector<16x16xf32>, vector<32x16xf32> -> vector<32x16xf32>
    %c0_3 = arith.constant 0 : index
    %c0_4 = arith.constant 0 : index
    %3 = vector.load %arg3[%c0_3, %c0_4] : memref<32x1xf32, #tpu.memory_space<vmem>>, vector<32x1xf32>
    %4 = vector.broadcast %3 : vector<32x1xf32> to vector<32x16xf32>
    %5 = arith.addf %2, %4 : vector<32x16xf32>
    %cst_5 = arith.constant 0.000000e+00 : f32
    %6 = vector.broadcast %cst_5 : f32 to vector<32x16xf32>
    %7 = arith.maximumf %5, %6 : vector<32x16xf32>
    %c0_6 = arith.constant 0 : index
    %c0_7 = arith.constant 0 : index
    %8 = vector.load %arg4[%c0_6, %c0_7] : memref<32x1xf32, #tpu.memory_space<vmem>>, vector<32x1xf32>
    %9 = vector.broadcast %8 : vector<32x1xf32> to vector<32x16xf32>
    %10 = arith.mulf %7, %9 : vector<32x16xf32>
    %cst_8 = arith.constant dense<0.000000e+00> : vector<16xf32>
    %11 = vector.multi_reduction <add>, %10, %cst_8 [0] : vector<32x16xf32> to vector<16xf32>
    %12 = vector.shape_cast %11 : vector<16xf32> to vector<1x16xf32>
    %c0_9 = arith.constant 0 : index
    %13 = memref.load %arg5[%c0_9] : memref<1xf32, #tpu.memory_space<smem>>
    %14 = vector.broadcast %13 : f32 to vector<1x16xf32>
    %15 = arith.addf %12, %14 : vector<1x16xf32>
    %c0_10 = arith.constant 0 : index
    %c0_11 = arith.constant 0 : index
    %16 = vector.load %arg6[%c0_10, %c0_11] : memref<1x16xf32, #tpu.memory_space<vmem>>, vector<1x16xf32>
    tpu.vector_store %arg6[%c0_10, %c0_11], %15 {strides = array<i32>} : memref<1x16xf32, #tpu.memory_space<vmem>>, vector<1x16xf32>,
    return
  }
  func.func @transform_0(%arg0: i32) -> (i32, i32) {
    %c0_i32 = arith.constant 0 : i32
    %c0_i32_0 = arith.constant 0 : i32
    return %arg0, %c0_i32 : i32, i32
  }
  func.func @transform_1(%arg0: i32) -> (i32, i32) {
    %c0_i32 = arith.constant 0 : i32
    %c0_i32_0 = arith.constant 0 : i32
    %c0_i32_1 = arith.constant 0 : i32
    return %c0_i32, %c0_i32_0 : i32, i32
  }
  func.func @transform_2(%arg0: i32) -> (i32, i32) {
    %c0_i32 = arith.constant 0 : i32
    %c0_i32_0 = arith.constant 0 : i32
    %c0_i32_1 = arith.constant 0 : i32
    return %c0_i32, %c0_i32_0 : i32, i32
  }
  func.func @transform_3(%arg0: i32) -> (i32, i32) {
    %c0_i32 = arith.constant 0 : i32
    %c0_i32_0 = arith.constant 0 : i32
    %c0_i32_1 = arith.constant 0 : i32
    return %c0_i32, %c0_i32_0 : i32, i32
  }
  func.func @transform_4(%arg0: i32) -> i32 {
    %c0_i32 = arith.constant 0 : i32
    %c0_i32_0 = arith.constant 0 : i32
    return %c0_i32 : i32
  }
  func.func @transform_5(%arg0: i32) -> (i32, i32) {
    %c0_i32 = arith.constant 0 : i32
    %c0_i32_0 = arith.constant 0 : i32
    return %c0_i32, %arg0 : i32, i32
  }
}

</mosaic_0001>

<llo_original>
// kernel: tpu_custom_call.1
$region0: #{tpu_custom_call.1}
  #allocation0 [shape = 'u32[]', space=smem, size = 0x4, offset = 0x4, fixed_abs, tag = 'smem constant byte address 0x4 - core index']
  #allocation1 [shape = 'u32[144,128]{1,0:T(1,128)}', space=vmem, size = 0x12000, scoped, tag = 'internal scratch']
  #allocation2 [shape = 'f32[1]{0:T(128)S(6)}', space=smem, size = 0x200, scoped, tag = 'scoped memory for tpu_custom_call.1']
  %s0 = inlined_call_operand.vmem [shape: f32[16,16], index: 0, kind: input, shape index: {}]
  %s1 = inlined_call_operand.vmem [shape: f32[32,16], index: 1, kind: input, shape index: {}]
  %s2 = inlined_call_operand.vmem [shape: f32[32,1], index: 2, kind: input, shape index: {}]
  %s3 = inlined_call_operand.vmem [shape: f32[32,1], index: 3, kind: input, shape index: {}]
  %s4 = inlined_call_operand.<no memory space> [shape: f32[1], index: 4, kind: input, shape index: {}]
  %s5 = inlined_call_operand.hbm [shape: f32[1,16], index: 5, kind: output, shape index: {}]
  %s6 = sld [smem:[#allocation0]]
  $region30: #{tpu_custom_call.1} parent=0
    _
  %s8 = ssub.s32 1, %s6
  %s9 = scalar_select 0, %s8, %s6
  %10 = sst [smem:[#allocation2]] %s4
  $region1: #{tpu_custom_call.1} parent=0
    #allocation3 [shape = 'u8[512]{0}', space=vmem, size = 0x400, scoped, tag = 'output window, operand 0, single buffered']
    #allocation4 [shape = 's32[1]{0}', space=sflag, size = 0x4, scoped, tag = 'scoped memory for tpu_custom_call.1']
    %11 = vsyncpa [#allocation4], 0
    // Predicated region
    $region2: #{tpu_custom_call.1} parent=1 // pred_check
      _
    $region3: #{tpu_custom_call.1} parent=1 // pred_check_branch
      %13 = sbr.rel (0) target = $region5
    $region4: #{tpu_custom_call.1} parent=1 // pred_region
      _
    $region5: #{tpu_custom_call.1} parent=1 // pred_fallthru
      _
    // Predicated region
    $region6: #{tpu_custom_call.1} parent=1 // pred_check
      _
    $region7: #{tpu_custom_call.1} parent=1 // pred_check_branch
      %15 = sbr.rel (0) target = $region9
    $region8: #{tpu_custom_call.1} parent=1 // pred_region
      _
    $region9: #{tpu_custom_call.1} parent=1 // pred_fallthru
      _
    // Predicated region
    $region10: #{tpu_custom_call.1} parent=1 // pred_check
      _
    $region11: #{tpu_custom_call.1} parent=1 // pred_check_branch
      %17 = sbr.rel (0) target = $region13
    $region12: #{tpu_custom_call.1} parent=1 // pred_region
      _
    $region13: #{tpu_custom_call.1} parent=1 // pred_fallthru
      _
    // Predicated region
    $region14: #{tpu_custom_call.1} parent=1 // pred_check
      _
    $region15: #{tpu_custom_call.1} parent=1 // pred_check_branch
      %19 = sbr.rel (0) target = $region17
    $region16: #{tpu_custom_call.1} parent=1 // pred_region
      _
    $region17: #{tpu_custom_call.1} parent=1 // pred_fallthru
      _
    // Predicated region
    $region18: #{tpu_custom_call.1} parent=1 // pred_check
      _
    $region19: #{tpu_custom_call.1} parent=1 // pred_check_branch
      %21 = sbr.rel (0) target = $region21
    $region20: #{tpu_custom_call.1} parent=1 // pred_region
      _
    $region21: #{tpu_custom_call.1} parent=1 // pred_fallthru
      _
    %v22 = vld [vmem:[%s1] sm:$0xff]
    %v23 = vld [vmem:[%s1 + $0x8] sm:$0xff]
    %v24 = vld [vmem:[%s1 + $0x10] sm:$0xff]
    %v25 = vld [vmem:[%s1 + $0x18] sm:$0xff]
    %v26 = vld [vmem:[%s0] sm:$0xff]
    %v27 = vld [vmem:[%s0 + $0x8] sm:$0xff]
    %v28 = vld [vmem:[%s2] sm:$0xff]
    %v29 = vld [vmem:[%s2 + $0x8] sm:$0xff]
    %v30 = vld [vmem:[%s2 + $0x10] sm:$0xff]
    %v31 = vld [vmem:[%s2 + $0x18] sm:$0xff]
    %33 = vset.pattern.permute.xlu0 0
    %34 = vperm.xlu0 %33, %v28
    %v35 = vpop.permute.xlu0 %34
    %38 = vset.pattern.permute.xlu0 0
    %39 = vperm.xlu0 %38, %v29
    %v40 = vpop.permute.xlu0 %39
    %43 = vset.pattern.permute.xlu0 0
    %44 = vperm.xlu0 %43, %v30
    %v45 = vpop.permute.xlu0 %44
    %48 = vset.pattern.permute.xlu0 0
    %49 = vperm.xlu0 %48, %v31
    %v50 = vpop.permute.xlu0 %49
    %vm52 = vcmask 130048
    %v54 = vsel %vm52, %v22, 0
    %v57 = vsel %vm52, %v23, 0
    %v60 = vsel %vm52, %v24, 0
    %v63 = vsel %vm52, %v25, 0
    %v66 = vsel %vm52, %v26, 0
    %v69 = vsel %vm52, %v27, 0
    %71 = vmatprep.subr.mxu0 0.0
    %72 = vmatpush1.xpose.msra.mxu0 %v66
    %73 = vmatprep.subr.mxu0 0.0
    %74 = vmatpush1.xpose.msra.mxu0 %v69
    %75 = vmatprep.subr.mxu0 0.0
    %76 = vmatpush1.xpose.msra.mxu0 0.0
    %77 = vmatprep.subr.mxu0 0.0
    %78 = vmatpush1.xpose.msra.mxu0 0.0
    %79 = vmatprep.subr.mxu0 0.0
    %80 = vmatpush1.xpose.msra.mxu0 0.0
    %81 = vmatprep.subr.mxu0 0.0
    %82 = vmatpush1.xpose.msra.mxu0 0.0
    %83 = vmatprep.subr.mxu0 0.0
    %84 = vmatpush1.xpose.msra.mxu0 0.0
    %85 = vmatprep.subr.mxu0 0.0
    %86 = vmatpush1.xpose.msra.mxu0 0.0
    %87 = vmatprep.subr.mxu0 0.0
    %88 = vmatpush1.xpose.msra.mxu0 0.0
    %89 = vmatprep.subr.mxu0 0.0
    %90 = vmatpush1.xpose.msra.mxu0 0.0
    %91 = vmatprep.subr.mxu0 0.0
    %92 = vmatpush1.xpose.msra.mxu0 0.0
    %93 = vmatprep.subr.mxu0 0.0
    %94 = vmatpush1.xpose.msra.mxu0 0.0
    %95 = vmatprep.subr.mxu0 0.0
    %96 = vmatpush1.xpose.msra.mxu0 0.0
    %97 = vmatprep.subr.mxu0 0.0
    %98 = vmatpush1.xpose.msra.mxu0 0.0
    %99 = vmatprep.subr.mxu0 0.0
    %100 = vmatpush1.xpose.msra.mxu0 0.0
    %101 = vmatprep.subr.mxu0 0.0
    %102 = vmatpush1.xpose.msra.mxu0 0.0
    %103 = vmatprep.subr.mxu0 0.0
    %104 = vmatpush1.xpose.msra.mxu0 0.0
    %105 = vmatprep.subr.mxu0 0.0
    %106 = vmatpush1.xpose.msra.mxu0 0.0
    %107 = vmatprep.subr.mxu0 0.0
    %108 = vmatpush1.xpose.msra.mxu0 0.0
    %109 = vmatprep.subr.mxu0 0.0
    %110 = vmatpush1.xpose.msra.mxu0 0.0
    %111 = vmatprep.subr.mxu0 0.0
    %112 = vmatpush1.xpose.msra.mxu0 0.0
    %113 = vmatprep.subr.mxu0 0.0
    %114 = vmatpush1.xpose.msra.mxu0 0.0
    %115 = vmatprep.subr.mxu0 0.0
    %116 = vmatpush1.xpose.msra.mxu0 0.0
    %117 = vmatprep.subr.mxu0 0.0
    %118 = vmatpush1.xpose.msra.mxu0 0.0
    %119 = vmatprep.subr.mxu0 0.0
    %120 = vmatpush1.xpose.msra.mxu0 0.0
    %121 = vmatprep.subr.mxu0 0.0
    %122 = vmatpush1.xpose.msra.mxu0 0.0
    %123 = vmatprep.subr.mxu0 0.0
    %124 = vmatpush1.xpose.msra.mxu0 0.0
    %125 = vmatprep.subr.mxu0 0.0
    %126 = vmatpush1.xpose.msra.mxu0 0.0
    %127 = vmatprep.subr.mxu0 0.0
    %128 = vmatpush1.xpose.msra.mxu0 0.0
    %129 = vmatprep.subr.mxu0 0.0
    %130 = vmatpush1.xpose.msra.mxu0 0.0
    %131 = vmatprep.subr.mxu0 0.0
    %132 = vmatpush1.xpose.msra.mxu0 0.0
    %133 = vmatprep.subr.mxu0 0.0
    %134 = vmatpush1.xpose.msra.mxu0 0.0
    %135 = vmatprep.mubr.f32.mxu0 0.0
    %136 = vmatmul.mubr.f32.gmra.mrb[0].mxu0 %v54
    %v137 = vpop.f32.mrb[0].mxu0
    %v138 = vadd.f32 %v35, %v137
    %v139 = vpop.f32.mrb[0].mxu0
    %140 = vmatprep.mubr.f32.mxu0 0.0
    %141 = vmatmul.mubr.f32.gmra.mrb[0].mxu0 %v57
    %v142 = vpop.f32.mrb[0].mxu0
    %v143 = vadd.f32 %v40, %v142
    %v144 = vpop.f32.mrb[0].mxu0
    %145 = vmatprep.mubr.f32.mxu0 0.0
    %146 = vmatmul.mubr.f32.gmra.mrb[0].mxu0 %v60
    %v147 = vpop.f32.mrb[0].mxu0
    %v148 = vadd.f32 %v45, %v147
    %v149 = vpop.f32.mrb[0].mxu0
    %150 = vmatprep.mubr.f32.mxu0 0.0
    %151 = vmatmul.mubr.f32.gmra.mrb[0].mxu0 %v63
    %v152 = vpop.f32.mrb[0].mxu0
    %v153 = vadd.f32 %v50, %v152
    %v154 = vpop.f32.mrb[0].mxu0
    %155 = vdwg.mxu0
    %v156 = vmax.f32 %v138, 0.0
    %v157 = vmax.f32 %v143, 0.0
    %v158 = vmax.f32 %v148, 0.0
    %v159 = vmax.f32 %v153, 0.0
    %v160 = vld [vmem:[%s3] sm:$0xff]
    %v161 = vld [vmem:[%s3 + $0x8] sm:$0xff]
    %v162 = vld [vmem:[%s3 + $0x10] sm:$0xff]
    %v163 = vld [vmem:[%s3 + $0x18] sm:$0xff]
    %165 = vset.pattern.permute.xlu0 0
    %166 = vperm.xlu0 %165, %v160
    %v167 = vpop.permute.xlu0 %166
    %170 = vset.pattern.permute.xlu0 0
    %171 = vperm.xlu0 %170, %v161
    %v172 = vpop.permute.xlu0 %171
    %175 = vset.pattern.permute.xlu0 0
    %176 = vperm.xlu0 %175, %v162
    %v177 = vpop.permute.xlu0 %176
    %180 = vset.pattern.permute.xlu0 0
    %181 = vperm.xlu0 %180, %v163
    %v182 = vpop.permute.xlu0 %181
    %v184 = vmul.f32 %v156, %v167
    %v185 = vmul.f32 %v157, %v172
    %v186 = vmul.f32 %v158, %v177
    %v187 = vmul.f32 %v159, %v182
    %v188 = vsel %vm52, %v184, 0.0
    %v189 = vsel %vm52, %v185, 0.0
    %v190 = vadd.f32 %v188, %v189
    %v191 = vsel %vm52, %v186, 0.0
    %v192 = vadd.f32 %v190, %v191
    %v193 = vsel %vm52, %v187, 0.0
    %v194 = vadd.f32 %v192, %v193
    %v195 = vrot.slane %v194, 4
    %v196 = vadd.f32 %v194, %v195
    %v197 = vrot.slane %v196, 2
    %v198 = vadd.f32 %v196, %v197
    %v199 = vrot.slane %v198, 1
    %v200 = vadd.f32 %v198, %v199
    %s201 = sld [smem:[#allocation2]]
    %v202 = vstv %s201
    %v203 = vadd.f32 %v200, %v202
    %vm204 = vcmask 122880
    %205 = vst.msk [vmem:[#allocation3] sm:$0x1] %vm204, %v203
    // Predicated region
    $region22: #{tpu_custom_call.1} parent=1 // pred_check
      _
    $region23: #{tpu_custom_call.1} parent=1 // pred_check_branch
      %207 = sbr.rel (0) target = $region25
    $region24: #{tpu_custom_call.1} parent=1 // pred_region
      %s209 = ssub.s32 16, 16
      %210 = vsyncadd [#allocation4], %s209
      %s212 = sshll.u32 [#allocation3], 4
      %s213 = int_to_ptr.vmem [resolvable:$true] %s212
      %215 = dma.vmem_to_hbm [thread:$0]  %s213, 16, %s5, [#allocation4]
    $region25: #{tpu_custom_call.1} parent=1 // pred_fallthru
      _
    // Predicated region
    $region26: #{tpu_custom_call.1} parent=1 // pred_check
      _
    $region27: #{tpu_custom_call.1} parent=1 // pred_check_branch
      %217 = sbr.rel (0) target = $region29
    $region28: #{tpu_custom_call.1} parent=1 // pred_region
      %218 = dma.done [#allocation4], 16
    $region29: #{tpu_custom_call.1} parent=1 // pred_fallthru
      _
    %219 = vsyncpa [#allocation4], 1

</llo_original>
